<compile_context>
chip_gen: v7x
topology: tpu7x:2x2x1
jax: 0.10.0
libtpu: 0.0.40
codegen_flags: <defaults>
</compile_context>

<pallas_src>
import numpy as np
import jax
import jax.numpy as jnp
from jax import lax
from jax.experimental import pallas as pl
from jax.experimental.pallas import tpu as pltpu

N_QUBITS = 4
N_LAYERS = 2
DIM = 2 ** N_QUBITS
TB = 512          # batch tile (lane dimension), multiple of 128


# ----------------------------------------------------------------------------
# Host-side glue: fold the parameter-only tail of the circuit into observables
# ----------------------------------------------------------------------------
def _rx(t):
    c, s = np.cos(t / 2.0), np.sin(t / 2.0)
    return np.array([[c, -1j * s], [-1j * s, c]], dtype=np.complex128)


def _ry(t):
    c, s = np.cos(t / 2.0), np.sin(t / 2.0)
    return np.array([[c, -s], [s, c]], dtype=np.complex128)


def _rz(t):
    return np.array([[np.exp(-1j * t / 2.0), 0.0],
                     [0.0, np.exp(1j * t / 2.0)]], dtype=np.complex128)


_CNOT = np.array([[1, 0, 0, 0],
                  [0, 1, 0, 0],
                  [0, 0, 0, 1],
                  [0, 0, 1, 0]], dtype=np.complex128)


def build_fixed_unitary(rx, ry, rz, ent, n_qubits, n_layers):
    """Dense unitary of all gates that come after the data-encoding RY layer."""
    dim = 2 ** n_qubits

    def embed(gate, wire, width):
        left = np.eye(2 ** wire, dtype=np.complex128)
        right = np.eye(2 ** (n_qubits - wire - width), dtype=np.complex128)
        return np.kron(np.kron(left, gate), right)

    U = np.eye(dim, dtype=np.complex128)
    for layer in range(n_layers):
        for i in range(n_qubits):
            U = embed(_rx(rx[layer, i]), i, 1) @ U
            U = embed(_ry(ry[layer, i]), i, 1) @ U
            U = embed(_rz(rz[layer, i]), i, 1) @ U
        for i in range(n_qubits - 1):
            U = embed(_CNOT, i, 2) @ U
            U = embed(_rz(ent[layer, i]), i + 1, 1) @ U
    return U


def build_observables(params, n_qubits, n_layers):
    """M_i = Re(U^H Z_i U), stacked into a (n_qubits * dim, dim) float32 array.

    Since the encoded product state psi0 is real,
        <Z_i> = psi0^T Re(U^H Z_i U) psi0
    (the antisymmetric imaginary part contributes nothing).
    """
    rx, ry, rz, ent = (np.asarray(p, np.float64) for p in params)
    dim = 2 ** n_qubits
    U = build_fixed_unitary(rx, ry, rz, ent, n_qubits, n_layers)
    ks = np.arange(dim)
    ms = []
    for i in range(n_qubits):
        z = 1.0 - 2.0 * ((ks >> (n_qubits - 1 - i)) & 1)         # PauliZ diag
        ms.append((U.conj().T @ (z[:, None] * U)).real)
    return np.concatenate(ms, axis=0).astype(np.float32)          # (nq*dim, dim)


# ----------------------------------------------------------------------------
# Pallas kernel: angle encoding + product state + observable contraction
# ----------------------------------------------------------------------------
def qcircuit_kernel(x_ref, m_ref, out_ref):
    nq, tb = x_ref.shape            # (n_qubits, TB)   batch on the lane dim
    dim = m_ref.shape[1]            # 2**n_qubits

    # angle encoding: theta = tanh(x) * pi  (EUP tanh, lane-dense)
    theta = jnp.tanh(x_ref[...]) * np.pi
    half = 0.5 * theta
    c = jnp.cos(half)               # (nq, TB) amplitude of |0> per wire
    s = jnp.sin(half)               # (nq, TB) amplitude of |1> per wire

    # basis-index bits generated in-kernel (wire 0 = most-significant bit)
    ks = lax.broadcasted_iota(jnp.int32, (dim, 1), 0)             # (dim, 1)

    # product state psi0[k, b] = prod_i (c[i,b] if bit_i(k)==0 else s[i,b])
    psi0 = None
    for i in range(nq):                                           # static unroll
        bit = ((ks >> (nq - 1 - i)) & 1).astype(jnp.float32)      # (dim, 1)
        fac = c[i:i + 1, :] * (1.0 - bit) + s[i:i + 1, :] * bit   # (dim, TB)
        psi0 = fac if psi0 is None else psi0 * fac

    # Y[i*dim + j, b] = sum_k M_i[j, k] * psi0[k, b]   (one small fused matmul)
    y = jnp.dot(m_ref[...], psi0, preferred_element_type=jnp.float32)

    # <Z_i>[b] = sum_j psi0[j, b] * Y[i*dim + j, b]
    rows = []
    for i in range(nq):                                           # static unroll
        prod = psi0 * y[i * dim:(i + 1) * dim, :]                 # (dim, TB)
        rows.append(jnp.sum(prod, axis=0, keepdims=True))         # (1, TB)
    out_ref[...] = jnp.concatenate(rows, axis=0)                  # (nq, TB)


# ----------------------------------------------------------------------------
# Wrapper
# ----------------------------------------------------------------------------
def quantum_circuit_forward(x, params, n_qubits=N_QUBITS, n_layers=N_LAYERS,
                            batch_tile=TB):
    x = jnp.atleast_2d(jnp.asarray(x, jnp.float32))
    batch, feat = x.shape

    # pad / truncate each sample to n_qubits (same as the PyTorch forward)
    if feat > n_qubits:
        x_q = x[:, :n_qubits]
    elif feat < n_qubits:
        x_q = jnp.pad(x, ((0, 0), (0, n_qubits - feat)))
    else:
        x_q = x

    dim = 2 ** n_qubits
    m_stack = jnp.asarray(build_observables(params, n_qubits, n_layers))

    # batch on the lane (last) dimension, padded to a multiple of the tile
    n_blocks = pl.cdiv(batch, batch_tile)
    padded = n_blocks * batch_tile
    x_t = jnp.pad(x_q.T, ((0, 0), (0, padded - batch)))           # (nq, padded)

    out_t = pl.pallas_call(
        qcircuit_kernel,
        out_shape=jax.ShapeDtypeStruct((n_qubits, padded), jnp.float32),
        grid=(n_blocks,),
        in_specs=[
            pl.BlockSpec((n_qubits, batch_tile), lambda b: (0, b)),   # x tile
            pl.BlockSpec((n_qubits * dim, dim), lambda b: (0, 0)),    # resident
        ],
        out_specs=pl.BlockSpec((n_qubits, batch_tile), lambda b: (0, b)),
        compiler_params=pltpu.CompilerParams(
            dimension_semantics=("parallel",)),
    )(x_t, m_stack)

    return out_t[:, :batch].T                                      # (batch, nq)


# ----------------------------------------------------------------------------
# Pure-numpy reference (gate-by-gate statevector simulation)
# ----------------------------------------------------------------------------
def reference_forward(x, params, n_qubits=N_QUBITS, n_layers=N_LAYERS):
    rx, ry, rz, ent = (np.asarray(p, np.float64) for p in params)
    x = np.atleast_2d(np.asarray(x, np.float64))
    batch, feat = x.shape
    if feat > n_qubits:
        x = x[:, :n_qubits]
    elif feat < n_qubits:
        x = np.pad(x, ((0, 0), (0, n_qubits - feat)))
    theta = np.tanh(x) * np.pi
    dim = 2 ** n_qubits

    state = np.zeros((batch, dim), dtype=np.complex128)
    state[:, 0] = 1.0

    def apply1(st, G, wire):
        l, r = 2 ** wire, 2 ** (n_qubits - wire - 1)
        st = st.reshape(batch, l, 2, r)
        if G.ndim == 2:
            st = np.einsum('ab,xlbr->xlar', G, st)
        else:
            st = np.einsum('xab,xlbr->xlar', G, st)
        return st.reshape(batch, dim)

    def apply2(st, G4, wire):
        l, r = 2 ** wire, 2 ** (n_qubits - wire - 2)
        st = st.reshape(batch, l, 4, r)
        st = np.einsum('ab,xlbr->xlar', G4, st)
        return st.reshape(batch, dim)

    for i in range(n_qubits):
        c, s = np.cos(theta[:, i] / 2.0), np.sin(theta[:, i] / 2.0)
        G = np.zeros((batch, 2, 2), dtype=np.complex128)
        G[:, 0, 0], G[:, 0, 1], G[:, 1, 0], G[:, 1, 1] = c, -s, s, c
        state = apply1(state, G, i)
    for layer in range(n_layers):
        for i in range(n_qubits):
            state = apply1(state, _rx(rx[layer, i]), i)
            state = apply1(state, _ry(ry[layer, i]), i)
            state = apply1(state, _rz(rz[layer, i]), i)
        for i in range(n_qubits - 1):
            state = apply2(state, _CNOT, i)
            state = apply1(state, _rz(ent[layer, i]), i + 1)

    probs = np.abs(state) ** 2
    ks = np.arange(dim)
    signs = np.stack(
        [1 - 2 * ((ks >> (n_qubits - 1 - i)) & 1) for i in range(n_qubits)],
        axis=1).astype(np.float64)
    return probs @ signs


if __name__ == "__main__":
    key = jax.random.PRNGKey(0)
    k_x, k_x2, k_rx, k_ry, k_rz, k_ent = jax.random.split(key, 6)

    params = (
        jax.random.normal(k_rx, (N_LAYERS, N_QUBITS), dtype=jnp.float32),
        jax.random.normal(k_ry, (N_LAYERS, N_QUBITS), dtype=jnp.float32),
        jax.random.normal(k_rz, (N_LAYERS, N_QUBITS), dtype=jnp.float32),
        jax.random.normal(k_ent, (N_LAYERS, N_QUBITS - 1), dtype=jnp.float32),
    )

    # small batch (single grid step, exercises padding of the lane dim)
    batch = 8
    x = jax.random.normal(k_x, (batch, N_QUBITS), dtype=jnp.float32)
    out = jax.block_until_ready(quantum_circuit_forward(x, params))
    ref = reference_forward(np.asarray(x), params)
    np.testing.assert_allclose(np.asarray(out), ref, rtol=1e-3, atol=1e-4)

    # larger batch (multiple grid steps over the batch-tiled lane dimension)
    batch2 = 700
    x2 = jax.random.normal(k_x2, (batch2, N_QUBITS), dtype=jnp.float32)
    out2 = jax.block_until_ready(quantum_circuit_forward(x2, params))
    ref2 = reference_forward(np.asarray(x2), params)
    np.testing.assert_allclose(np.asarray(out2), ref2, rtol=1e-3, atol=1e-4)

    print("KERNEL_OK")
</pallas_src>

<mosaic_0001>
module attributes {stable_mosaic.version = 11 : i64} {
  func.func @qcircuit_kernel(%arg0: i32, %arg1: memref<4x512xf32, #tpu.memory_space<vmem>>, %arg2: memref<64x16xf32, #tpu.memory_space<vmem>>, %arg3: memref<4x512xf32, #tpu.memory_space<vmem>>) attributes {dimension_semantics = [#tpu.dimension_semantics<parallel>], iteration_bounds = array<i64: 1>, scalar_prefetch = 0 : i64, scratch_operands = 0 : i64, tpu.core_type = #tpu.core_type<tc>, window_params = [{transform_indices = @transform_0, window_bounds = array<i64: 4, 512>}, {pipeline_mode = #tpu.pipeline_mode<synchronous>, transform_indices = @transform_1, window_bounds = array<i64: 64, 16>}, {transform_indices = @transform_2, window_bounds = array<i64: 4, 512>}]} {
    %c0 = arith.constant 0 : index
    %c0_0 = arith.constant 0 : index
    %0 = vector.load %arg1[%c0, %c0_0] : memref<4x512xf32, #tpu.memory_space<vmem>>, vector<4x512xf32>
    %1 = math.tanh %0 : vector<4x512xf32>
    %cst = arith.constant 3.14159274 : f32
    %2 = vector.broadcast %cst : f32 to vector<4x512xf32>
    %3 = arith.mulf %1, %2 : vector<4x512xf32>
    %cst_1 = arith.constant 5.000000e-01 : f32
    %4 = vector.broadcast %cst_1 : f32 to vector<4x512xf32>
    %5 = arith.mulf %4, %3 : vector<4x512xf32>
    %6 = math.cos %5 : vector<4x512xf32>
    %7 = math.sin %5 : vector<4x512xf32>
    %8 = tpu.iota {dimensions = array<i32: 0>} : vector<16x1xi32>
    %c3_i32 = arith.constant 3 : i32
    %9 = vector.broadcast %c3_i32 : i32 to vector<16x1xi32>
    %10 = arith.shrsi %8, %9 : vector<16x1xi32>
    %c1_i32 = arith.constant 1 : i32
    %11 = vector.broadcast %c1_i32 : i32 to vector<16x1xi32>
    %12 = arith.andi %10, %11 : vector<16x1xi32>
    %13 = arith.sitofp %12 : vector<16x1xi32> to vector<16x1xf32>
    %14 = vector.extract_strided_slice %6 {offsets = [0, 0], sizes = [1, 512], strides = [1, 1]} : vector<4x512xf32> to vector<1x512xf32>
    %cst_2 = arith.constant 1.000000e+00 : f32
    %15 = vector.broadcast %cst_2 : f32 to vector<16x1xf32>
    %16 = arith.subf %15, %13 : vector<16x1xf32>
    %17 = vector.broadcast %14 : vector<1x512xf32> to vector<16x512xf32>
    %18 = vector.broadcast %16 : vector<16x1xf32> to vector<16x512xf32>
    %19 = arith.mulf %17, %18 : vector<16x512xf32>
    %20 = vector.extract_strided_slice %7 {offsets = [0, 0], sizes = [1, 512], strides = [1, 1]} : vector<4x512xf32> to vector<1x512xf32>
    %21 = vector.broadcast %20 : vector<1x512xf32> to vector<16x512xf32>
    %22 = vector.broadcast %13 : vector<16x1xf32> to vector<16x512xf32>
    %23 = arith.mulf %21, %22 : vector<16x512xf32>
    %24 = arith.addf %19, %23 : vector<16x512xf32>
    %c2_i32 = arith.constant 2 : i32
    %25 = vector.broadcast %c2_i32 : i32 to vector<16x1xi32>
    %26 = arith.shrsi %8, %25 : vector<16x1xi32>
    %c1_i32_3 = arith.constant 1 : i32
    %27 = vector.broadcast %c1_i32_3 : i32 to vector<16x1xi32>
    %28 = arith.andi %26, %27 : vector<16x1xi32>
    %29 = arith.sitofp %28 : vector<16x1xi32> to vector<16x1xf32>
    %30 = vector.extract_strided_slice %6 {offsets = [1, 0], sizes = [1, 512], strides = [1, 1]} : vector<4x512xf32> to vector<1x512xf32>
    %cst_4 = arith.constant 1.000000e+00 : f32
    %31 = vector.broadcast %cst_4 : f32 to vector<16x1xf32>
    %32 = arith.subf %31, %29 : vector<16x1xf32>
    %33 = vector.broadcast %30 : vector<1x512xf32> to vector<16x512xf32>
    %34 = vector.broadcast %32 : vector<16x1xf32> to vector<16x512xf32>
    %35 = arith.mulf %33, %34 : vector<16x512xf32>
    %36 = vector.extract_strided_slice %7 {offsets = [1, 0], sizes = [1, 512], strides = [1, 1]} : vector<4x512xf32> to vector<1x512xf32>
    %37 = vector.broadcast %36 : vector<1x512xf32> to vector<16x512xf32>
    %38 = vector.broadcast %29 : vector<16x1xf32> to vector<16x512xf32>
    %39 = arith.mulf %37, %38 : vector<16x512xf32>
    %40 = arith.addf %35, %39 : vector<16x512xf32>
    %41 = arith.mulf %24, %40 : vector<16x512xf32>
    %c1_i32_5 = arith.constant 1 : i32
    %42 = vector.broadcast %c1_i32_5 : i32 to vector<16x1xi32>
    %43 = arith.shrsi %8, %42 : vector<16x1xi32>
    %c1_i32_6 = arith.constant 1 : i32
    %44 = vector.broadcast %c1_i32_6 : i32 to vector<16x1xi32>
    %45 = arith.andi %43, %44 : vector<16x1xi32>
    %46 = arith.sitofp %45 : vector<16x1xi32> to vector<16x1xf32>
    %47 = vector.extract_strided_slice %6 {offsets = [2, 0], sizes = [1, 512], strides = [1, 1]} : vector<4x512xf32> to vector<1x512xf32>
    %cst_7 = arith.constant 1.000000e+00 : f32
    %48 = vector.broadcast %cst_7 : f32 to vector<16x1xf32>
    %49 = arith.subf %48, %46 : vector<16x1xf32>
    %50 = vector.broadcast %47 : vector<1x512xf32> to vector<16x512xf32>
    %51 = vector.broadcast %49 : vector<16x1xf32> to vector<16x512xf32>
    %52 = arith.mulf %50, %51 : vector<16x512xf32>
    %53 = vector.extract_strided_slice %7 {offsets = [2, 0], sizes = [1, 512], strides = [1, 1]} : vector<4x512xf32> to vector<1x512xf32>
    %54 = vector.broadcast %53 : vector<1x512xf32> to vector<16x512xf32>
    %55 = vector.broadcast %46 : vector<16x1xf32> to vector<16x512xf32>
    %56 = arith.mulf %54, %55 : vector<16x512xf32>
    %57 = arith.addf %52, %56 : vector<16x512xf32>
    %58 = arith.mulf %41, %57 : vector<16x512xf32>
    %c0_i32 = arith.constant 0 : i32
    %59 = vector.broadcast %c0_i32 : i32 to vector<16x1xi32>
    %60 = arith.shrsi %8, %59 : vector<16x1xi32>
    %c1_i32_8 = arith.constant 1 : i32
    %61 = vector.broadcast %c1_i32_8 : i32 to vector<16x1xi32>
    %62 = arith.andi %60, %61 : vector<16x1xi32>
    %63 = arith.sitofp %62 : vector<16x1xi32> to vector<16x1xf32>
    %64 = vector.extract_strided_slice %6 {offsets = [3, 0], sizes = [1, 512], strides = [1, 1]} : vector<4x512xf32> to vector<1x512xf32>
    %cst_9 = arith.constant 1.000000e+00 : f32
    %65 = vector.broadcast %cst_9 : f32 to vector<16x1xf32>
    %66 = arith.subf %65, %63 : vector<16x1xf32>
    %67 = vector.broadcast %64 : vector<1x512xf32> to vector<16x512xf32>
    %68 = vector.broadcast %66 : vector<16x1xf32> to vector<16x512xf32>
    %69 = arith.mulf %67, %68 : vector<16x512xf32>
    %70 = vector.extract_strided_slice %7 {offsets = [3, 0], sizes = [1, 512], strides = [1, 1]} : vector<4x512xf32> to vector<1x512xf32>
    %71 = vector.broadcast %70 : vector<1x512xf32> to vector<16x512xf32>
    %72 = vector.broadcast %63 : vector<16x1xf32> to vector<16x512xf32>
    %73 = arith.mulf %71, %72 : vector<16x512xf32>
    %74 = arith.addf %69, %73 : vector<16x512xf32>
    %75 = arith.mulf %58, %74 : vector<16x512xf32>
    %c0_10 = arith.constant 0 : index
    %c0_11 = arith.constant 0 : index
    %76 = vector.load %arg2[%c0_10, %c0_11] : memref<64x16xf32, #tpu.memory_space<vmem>>, vector<64x16xf32>
    %cst_12 = arith.constant dense<0.000000e+00> : vector<64x512xf32>
    %77 = tpu.matmul %76, %75, %cst_12 {dimension_numbers = #tpu.dot_dimension_numbers<[1], [0], [0], [1], [0, 0, 1, 1], [], []>} : vector<64x16xf32>, vector<16x512xf32>, vector<64x512xf32> -> vector<64x512xf32>
    %78 = vector.extract_strided_slice %77 {offsets = [0, 0], sizes = [16, 512], strides = [1, 1]} : vector<64x512xf32> to vector<16x512xf32>
    %79 = arith.mulf %75, %78 : vector<16x512xf32>
    %cst_13 = arith.constant dense<0.000000e+00> : vector<512xf32>
    %80 = vector.multi_reduction <add>, %79, %cst_13 [0] : vector<16x512xf32> to vector<512xf32>
    %81 = vector.shape_cast %80 : vector<512xf32> to vector<1x512xf32>
    %82 = vector.extract_strided_slice %77 {offsets = [16, 0], sizes = [16, 512], strides = [1, 1]} : vector<64x512xf32> to vector<16x512xf32>
    %83 = arith.mulf %75, %82 : vector<16x512xf32>
    %cst_14 = arith.constant dense<0.000000e+00> : vector<512xf32>
    %84 = vector.multi_reduction <add>, %83, %cst_14 [0] : vector<16x512xf32> to vector<512xf32>
    %85 = vector.shape_cast %84 : vector<512xf32> to vector<1x512xf32>
    %86 = vector.extract_strided_slice %77 {offsets = [32, 0], sizes = [16, 512], strides = [1, 1]} : vector<64x512xf32> to vector<16x512xf32>
    %87 = arith.mulf %75, %86 : vector<16x512xf32>
    %cst_15 = arith.constant dense<0.000000e+00> : vector<512xf32>
    %88 = vector.multi_reduction <add>, %87, %cst_15 [0] : vector<16x512xf32> to vector<512xf32>
    %89 = vector.shape_cast %88 : vector<512xf32> to vector<1x512xf32>
    %90 = vector.extract_strided_slice %77 {offsets = [48, 0], sizes = [16, 512], strides = [1, 1]} : vector<64x512xf32> to vector<16x512xf32>
    %91 = arith.mulf %75, %90 : vector<16x512xf32>
    %cst_16 = arith.constant dense<0.000000e+00> : vector<512xf32>
    %92 = vector.multi_reduction <add>, %91, %cst_16 [0] : vector<16x512xf32> to vector<512xf32>
    %93 = vector.shape_cast %92 : vector<512xf32> to vector<1x512xf32>
    %94 = tpu.concatenate %81, %85, %89, %93 in 0 : vector<1x512xf32>, vector<1x512xf32>, vector<1x512xf32>, vector<1x512xf32> -> vector<4x512xf32>
    %c0_17 = arith.constant 0 : index
    %c0_18 = arith.constant 0 : index
    %95 = vector.load %arg3[%c0_17, %c0_18] : memref<4x512xf32, #tpu.memory_space<vmem>>, vector<4x512xf32>
    tpu.vector_store %arg3[%c0_17, %c0_18], %94 {strides = array<i32>} : memref<4x512xf32, #tpu.memory_space<vmem>>, vector<4x512xf32>,
    return
  }
  func.func @transform_0(%arg0: i32) -> (i32, i32) {
    %c0_i32 = arith.constant 0 : i32
    %c0_i32_0 = arith.constant 0 : i32
    return %c0_i32, %arg0 : i32, i32
  }
  func.func @transform_1(%arg0: i32) -> (i32, i32) {
    %c0_i32 = arith.constant 0 : i32
    %c0_i32_0 = arith.constant 0 : i32
    %c0_i32_1 = arith.constant 0 : i32
    return %c0_i32, %c0_i32_0 : i32, i32
  }
  func.func @transform_2(%arg0: i32) -> (i32, i32) {
    %c0_i32 = arith.constant 0 : i32
    %c0_i32_0 = arith.constant 0 : i32
    return %c0_i32, %arg0 : i32, i32
  }
}

</mosaic_0001>

<llo_original>
// kernel: tpu_custom_call.1
$region0: #{tpu_custom_call.1}
  #allocation0 [shape = 'u32[]', space=smem, size = 0x4, offset = 0x4, fixed_abs, tag = 'smem constant byte address 0x4 - core index']
  #allocation1 [shape = 'u32[144,128]{1,0:T(1,128)}', space=vmem, size = 0x12000, scoped, tag = 'internal scratch']
  %s0 = inlined_call_operand.vmem [shape: f32[4,512], index: 0, kind: input, shape index: {}]
  %s1 = inlined_call_operand.vmem [shape: f32[64,16], index: 1, kind: input, shape index: {}]
  %s2 = inlined_call_operand.hbm [shape: f32[4,512], index: 2, kind: output, shape index: {}]
  %s3 = sld [smem:[#allocation0]]
  $region18: #{tpu_custom_call.1} parent=0
    _
  %s5 = ssub.s32 1, %s3
  %s6 = scalar_select 0, %s5, %s3
  $region1: #{tpu_custom_call.1} parent=0
    #allocation2 [shape = 'u8[8192]{0}', space=vmem, size = 0x2000, scoped, tag = 'output window, operand 0, single buffered']
    #allocation3 [shape = 's32[1]{0}', space=sflag, size = 0x4, scoped, tag = 'scoped memory for tpu_custom_call.1']
    %7 = vsyncpa [#allocation3], 0
    // Predicated region
    $region2: #{tpu_custom_call.1} parent=1 // pred_check
      _
    $region3: #{tpu_custom_call.1} parent=1 // pred_check_branch
      %9 = sbr.rel (0) target = $region5
    $region4: #{tpu_custom_call.1} parent=1 // pred_region
      _
    $region5: #{tpu_custom_call.1} parent=1 // pred_fallthru
      _
    // Predicated region
    $region6: #{tpu_custom_call.1} parent=1 // pred_check
      _
    $region7: #{tpu_custom_call.1} parent=1 // pred_check_branch
      %11 = sbr.rel (0) target = $region9
    $region8: #{tpu_custom_call.1} parent=1 // pred_region
      _
    $region9: #{tpu_custom_call.1} parent=1 // pred_fallthru
      _
    %v12 = vld [vmem:[%s0] sm:$0xff]
    %v13 = vld [vmem:[%s0 + $0x8] sm:$0xff]
    %v14 = vtanh.pop %v12
    %v15 = vtanh.pop %v13
    %v16 = vmul.f32 %v14, 3.1415927
    %v17 = vmul.f32 %v15, 3.1415927
    %v18 = vmul.f32 %v16, 0.5
    %v19 = vmul.f32 %v17, 0.5
    %v20 = vand.u32 2147483647, %v18
    %vm21 = vcmp.le.f32.partialorder %v20, 0.7853982
    %vm22 = vcmp.lt.s32.totalorder %v18, 0
    %v23 = vand.u32 %v18, 2139095040
    %v24 = vshrl.u32 %v23, 23
    %v25 = vsub.s32 %v24, 127
    %v26 = vand.u32 2147483647, %v18
    %v27 = vand.u32 %v26, 8388607
    %v28 = vor.u32 %v27, 8388608
    %v29 = vsub.s32 0, %v28
    %v30 = vadd.s32 %v25, 1
    %vm31 = vcmp.gt.s32.totalorder %v30, 0
    %v32 = vsel %vm31, %v30, 0
    %v33 = vshrl.u32 %v32, 5
    %v34 = vand.u32 %v32, 31
    %v35 = vsub.s32 32, %v34
    %v36 = vshrl.u32 683565275, %v35
    %v37 = vshll.u32 683565275, %v34
    %v38 = vshrl.u32 2475754826, %v35
    %v39 = vor.u32 %v37, %v38
    %v40 = vshll.u32 2475754826, %v34
    %v41 = vshrl.u32 2131351028, %v35
    %v42 = vor.u32 %v40, %v41
    %v43 = vshll.u32 2131351028, %v34
    %v44 = vshrl.u32 2102212464, %v35
    %v45 = vor.u32 %v43, %v44
    %v46 = vshll.u32 2102212464, %v34
    %v47 = vshrl.u32 920167782, %v35
    %v48 = vor.u32 %v46, %v47
    %v49 = vshll.u32 920167782, %v34
    %v50 = vshrl.u32 1326507024, %v35
    %v51 = vor.u32 %v49, %v50
    %vm52 = vcmp.lt.s32.totalorder %v33, 1
    %vm53 = vcmp.lt.s32.totalorder %v33, 2
    %vm54 = vcmp.lt.s32.totalorder %v33, 3
    %vm55 = vcmp.lt.s32.totalorder %v33, 4
    %v56 = vsel %vm52, %v36, %v39
    %v57 = vsel %vm55, %v45, 2102212464
    %v58 = vsel %vm54, %v42, %v57
    %v59 = vsel %vm53, %v56, %v58
    %v60 = vsel %vm52, %v39, %v42
    %v61 = vsel %vm55, %v48, 920167782
    %v62 = vsel %vm54, %v45, %v61
    %v63 = vsel %vm53, %v60, %v62
    %v64 = vsel %vm52, %v42, %v45
    %v65 = vsel %vm55, %v51, 1326507024
    %v66 = vsel %vm54, %v48, %v65
    %v67 = vsel %vm53, %v64, %v66
    %v68 = vshll.u32 %v28, 8
    %v69 = vmul.u32.u64.compose %v68, %v67
    %v70 = vextract.low.u32 %v69
    %v71 = vextract.high.u32 %v69
    %v72 = vmul.u32.u64.compose %v68, %v63
    %v73 = vextract.low.u32 %v72
    %v74 = vextract.high.u32 %v72
    %v75 = vmul.u32 %v68, %v59
    %v76 = vadd.s32 %v71, %v73
    %vm77 = vc.u32 %v71, %v73
    %v78 = vadd.s32 %v74, 1
    %v79 = vsel %vm77, %v78, %v74
    %v80 = vadd.s32 %v75, %v79
    %v81 = vadd.s32 %v80, 536870912
    %v82 = vshrl.u32 %v81, 30
    %v83 = vshll.u32 %v82, 30
    %v84 = vsub.s32 %v80, %v83
    %vm85 = vcmp.lt.s32.totalorder %v84, 0
    %v86 = vsub.s32 0, %v84
    %v87 = vsel %vm85, %v86, %v84
    %v88 = vclz %v87
    %v89 = vsub.s32 %v88, 2
    %vm90 = vcmp.gt.s32.totalorder 0, %v89
    %v91 = vsel %vm90, 0, %v89
    %v92 = vsub.s32 32, %v91
    %v93 = vshll.u32 %v84, %v91
    %v94 = vshrl.u32 %v76, %v92
    %v95 = vor.u32 %v93, %v94
    %v96 = vsub.s32 4294967266, %v91
    %v97 = vadd.s32 %v96, 127
    %v98 = vshll.u32 %v97, 23
    %v99 = vor.u32 4788187, %v98
    %v100 = vand.u32 2147483647, %v99
    %v102 = vcvt.s32.f32 %v95
    %v103 = vmul.f32 %v102, %v100
    %v104 = vxor.u32 %v103, 2147483648
    %v105 = vsel %vm22, %v104, %v103
    %v106 = vsub.s32 4, %v82
    %v107 = vsel %vm22, %v106, %v82
    %v108 = vsel %vm21, %v18, %v105
    %v109 = vsel %vm21, 0, %v107
    %v110 = vcosq.f32.pop %v108
    %v111 = vsinq.f32.pop %v108
    %vm112 = vweird.f32 %v18
    %v113 = vand.u32 %v109, 3
    %vm114 = vcmp.lt.s32.totalorder %v113, 2
    %vm115 = vcmp.eq.s32.totalorder %v113, 0
    %v116 = vxor.u32 %v111, 2147483648
    %v117 = vsel %vm115, %v110, %v116
    %vm118 = vcmp.eq.s32.totalorder %v113, 2
    %v119 = vxor.u32 %v110, 2147483648
    %v120 = vsel %vm118, %v119, %v111
    %v121 = vsel %vm114, %v117, %v120
    %v122 = vsel %vm112, nan, %v121
    %v123 = vand.u32 2147483647, %v19
    %vm124 = vcmp.le.f32.partialorder %v123, 0.7853982
    %vm125 = vcmp.lt.s32.totalorder %v19, 0
    %v126 = vand.u32 %v19, 2139095040
    %v127 = vshrl.u32 %v126, 23
    %v128 = vsub.s32 %v127, 127
    %v129 = vand.u32 2147483647, %v19
    %v130 = vand.u32 %v129, 8388607
    %v131 = vor.u32 %v130, 8388608
    %v132 = vsub.s32 0, %v131
    %v133 = vadd.s32 %v128, 1
    %vm134 = vcmp.gt.s32.totalorder %v133, 0
    %v135 = vsel %vm134, %v133, 0
    %v136 = vshrl.u32 %v135, 5
    %v137 = vand.u32 %v135, 31
    %v138 = vsub.s32 32, %v137
    %v139 = vshrl.u32 683565275, %v138
    %v140 = vshll.u32 683565275, %v137
    %v141 = vshrl.u32 2475754826, %v138
    %v142 = vor.u32 %v140, %v141
    %v143 = vshll.u32 2475754826, %v137
    %v144 = vshrl.u32 2131351028, %v138
    %v145 = vor.u32 %v143, %v144
    %v146 = vshll.u32 2131351028, %v137
    %v147 = vshrl.u32 2102212464, %v138
    %v148 = vor.u32 %v146, %v147
    %v149 = vshll.u32 2102212464, %v137
    %v150 = vshrl.u32 920167782, %v138
    %v151 = vor.u32 %v149, %v150
    %v152 = vshll.u32 920167782, %v137
    %v153 = vshrl.u32 1326507024, %v138
    %v154 = vor.u32 %v152, %v153
    %vm155 = vcmp.lt.s32.totalorder %v136, 1
    %vm156 = vcmp.lt.s32.totalorder %v136, 2
    %vm157 = vcmp.lt.s32.totalorder %v136, 3
    %vm158 = vcmp.lt.s32.totalorder %v136, 4
    %v159 = vsel %vm155, %v139, %v142
    %v160 = vsel %vm158, %v148, 2102212464
    %v161 = vsel %vm157, %v145, %v160
    %v162 = vsel %vm156, %v159, %v161
    %v163 = vsel %vm155, %v142, %v145
    %v164 = vsel %vm158, %v151, 920167782
    %v165 = vsel %vm157, %v148, %v164
    %v166 = vsel %vm156, %v163, %v165
    %v167 = vsel %vm155, %v145, %v148
    %v168 = vsel %vm158, %v154, 1326507024
    %v169 = vsel %vm157, %v151, %v168
    %v170 = vsel %vm156, %v167, %v169
    %v171 = vshll.u32 %v131, 8
    %v172 = vmul.u32.u64.compose %v171, %v170
    %v173 = vextract.low.u32 %v172
    %v174 = vextract.high.u32 %v172
    %v175 = vmul.u32.u64.compose %v171, %v166
    %v176 = vextract.low.u32 %v175
    %v177 = vextract.high.u32 %v175
    %v178 = vmul.u32 %v171, %v162
    %v179 = vadd.s32 %v174, %v176
    %vm180 = vc.u32 %v174, %v176
    %v181 = vadd.s32 %v177, 1
    %v182 = vsel %vm180, %v181, %v177
    %v183 = vadd.s32 %v178, %v182
    %v184 = vadd.s32 %v183, 536870912
    %v185 = vshrl.u32 %v184, 30
    %v186 = vshll.u32 %v185, 30
    %v187 = vsub.s32 %v183, %v186
    %vm188 = vcmp.lt.s32.totalorder %v187, 0
    %v189 = vsub.s32 0, %v187
    %v190 = vsel %vm188, %v189, %v187
    %v191 = vclz %v190
    %v192 = vsub.s32 %v191, 2
    %vm193 = vcmp.gt.s32.totalorder 0, %v192
    %v194 = vsel %vm193, 0, %v192
    %v195 = vsub.s32 32, %v194
    %v196 = vshll.u32 %v187, %v194
    %v197 = vshrl.u32 %v179, %v195
    %v198 = vor.u32 %v196, %v197
    %v199 = vsub.s32 4294967266, %v194
    %v200 = vadd.s32 %v199, 127
    %v201 = vshll.u32 %v200, 23
    %v202 = vor.u32 4788187, %v201
    %v203 = vand.u32 2147483647, %v202
    %v205 = vcvt.s32.f32 %v198
    %v206 = vmul.f32 %v205, %v203
    %v207 = vxor.u32 %v206, 2147483648
    %v208 = vsel %vm125, %v207, %v206
    %v209 = vsub.s32 4, %v185
    %v210 = vsel %vm125, %v209, %v185
    %v211 = vsel %vm124, %v19, %v208
    %v212 = vsel %vm124, 0, %v210
    %v213 = vcosq.f32.pop %v211
    %v214 = vsinq.f32.pop %v211
    %vm215 = vweird.f32 %v19
    %v216 = vand.u32 %v212, 3
    %vm217 = vcmp.lt.s32.totalorder %v216, 2
    %vm218 = vcmp.eq.s32.totalorder %v216, 0
    %v219 = vxor.u32 %v214, 2147483648
    %v220 = vsel %vm218, %v213, %v219
    %vm221 = vcmp.eq.s32.totalorder %v216, 2
    %v222 = vxor.u32 %v213, 2147483648
    %v223 = vsel %vm221, %v222, %v214
    %v224 = vsel %vm217, %v220, %v223
    %v225 = vsel %vm215, nan, %v224
    %v226 = vand.u32 2147483647, %v18
    %vm227 = vcmp.le.f32.partialorder %v226, 0.7853982
    %vm228 = vcmp.lt.s32.totalorder %v18, 0
    %v229 = vand.u32 %v18, 2139095040
    %v230 = vshrl.u32 %v229, 23
    %v231 = vsub.s32 %v230, 127
    %v232 = vand.u32 2147483647, %v18
    %v233 = vand.u32 %v232, 8388607
    %v234 = vor.u32 %v233, 8388608
    %v235 = vsub.s32 0, %v234
    %v236 = vadd.s32 %v231, 1
    %vm237 = vcmp.gt.s32.totalorder %v236, 0
    %v238 = vsel %vm237, %v236, 0
    %v239 = vshrl.u32 %v238, 5
    %v240 = vand.u32 %v238, 31
    %v241 = vsub.s32 32, %v240
    %v242 = vshrl.u32 683565275, %v241
    %v243 = vshll.u32 683565275, %v240
    %v244 = vshrl.u32 2475754826, %v241
    %v245 = vor.u32 %v243, %v244
    %v246 = vshll.u32 2475754826, %v240
    %v247 = vshrl.u32 2131351028, %v241
    %v248 = vor.u32 %v246, %v247
    %v249 = vshll.u32 2131351028, %v240
    %v250 = vshrl.u32 2102212464, %v241
    %v251 = vor.u32 %v249, %v250
    %v252 = vshll.u32 2102212464, %v240
    %v253 = vshrl.u32 920167782, %v241
    %v254 = vor.u32 %v252, %v253
    %v255 = vshll.u32 920167782, %v240
    %v256 = vshrl.u32 1326507024, %v241
    %v257 = vor.u32 %v255, %v256
    %vm258 = vcmp.lt.s32.totalorder %v239, 1
    %vm259 = vcmp.lt.s32.totalorder %v239, 2
    %vm260 = vcmp.lt.s32.totalorder %v239, 3
    %vm261 = vcmp.lt.s32.totalorder %v239, 4
    %v262 = vsel %vm258, %v242, %v245
    %v263 = vsel %vm261, %v251, 2102212464
    %v264 = vsel %vm260, %v248, %v263
    %v265 = vsel %vm259, %v262, %v264
    %v266 = vsel %vm258, %v245, %v248
    %v267 = vsel %vm261, %v254, 920167782
    %v268 = vsel %vm260, %v251, %v267
    %v269 = vsel %vm259, %v266, %v268
    %v270 = vsel %vm258, %v248, %v251
    %v271 = vsel %vm261, %v257, 1326507024
    %v272 = vsel %vm260, %v254, %v271
    %v273 = vsel %vm259, %v270, %v272
    %v274 = vshll.u32 %v234, 8
    %v275 = vmul.u32.u64.compose %v274, %v273
    %v276 = vextract.low.u32 %v275
    %v277 = vextract.high.u32 %v275
    %v278 = vmul.u32.u64.compose %v274, %v269
    %v279 = vextract.low.u32 %v278
    %v280 = vextract.high.u32 %v278
    %v281 = vmul.u32 %v274, %v265
    %v282 = vadd.s32 %v277, %v279
    %vm283 = vc.u32 %v277, %v279
    %v284 = vadd.s32 %v280, 1
    %v285 = vsel %vm283, %v284, %v280
    %v286 = vadd.s32 %v281, %v285
    %v287 = vadd.s32 %v286, 536870912
    %v288 = vshrl.u32 %v287, 30
    %v289 = vshll.u32 %v288, 30
    %v290 = vsub.s32 %v286, %v289
    %vm291 = vcmp.lt.s32.totalorder %v290, 0
    %v292 = vsub.s32 0, %v290
    %v293 = vsel %vm291, %v292, %v290
    %v294 = vclz %v293
    %v295 = vsub.s32 %v294, 2
    %vm296 = vcmp.gt.s32.totalorder 0, %v295
    %v297 = vsel %vm296, 0, %v295
    %v298 = vsub.s32 32, %v297
    %v299 = vshll.u32 %v290, %v297
    %v300 = vshrl.u32 %v282, %v298
    %v301 = vor.u32 %v299, %v300
    %v302 = vsub.s32 4294967266, %v297
    %v303 = vadd.s32 %v302, 127
    %v304 = vshll.u32 %v303, 23
    %v305 = vor.u32 4788187, %v304
    %v306 = vand.u32 2147483647, %v305
    %v308 = vcvt.s32.f32 %v301
    %v309 = vmul.f32 %v308, %v306
    %v310 = vxor.u32 %v309, 2147483648
    %v311 = vsel %vm228, %v310, %v309
    %v312 = vsub.s32 4, %v288
    %v313 = vsel %vm228, %v312, %v288
    %v314 = vsel %vm227, %v18, %v311
    %v315 = vsel %vm227, 0, %v313
    %v316 = vcosq.f32.pop %v314
    %v317 = vsinq.f32.pop %v314
    %vm318 = vweird.f32 %v18
    %v319 = vadd.s32 %v315, 3
    %v320 = vand.u32 %v319, 3
    %vm321 = vcmp.lt.s32.totalorder %v320, 2
    %vm322 = vcmp.eq.s32.totalorder %v320, 0
    %v323 = vxor.u32 %v317, 2147483648
    %v324 = vsel %vm322, %v316, %v323
    %vm325 = vcmp.eq.s32.totalorder %v320, 2
    %v326 = vxor.u32 %v316, 2147483648
    %v327 = vsel %vm325, %v326, %v317
    %v328 = vsel %vm321, %v324, %v327
    %v329 = vsel %vm318, nan, %v328
    %v330 = vand.u32 2147483647, %v19
    %vm331 = vcmp.le.f32.partialorder %v330, 0.7853982
    %vm332 = vcmp.lt.s32.totalorder %v19, 0
    %v333 = vand.u32 %v19, 2139095040
    %v334 = vshrl.u32 %v333, 23
    %v335 = vsub.s32 %v334, 127
    %v336 = vand.u32 2147483647, %v19
    %v337 = vand.u32 %v336, 8388607
    %v338 = vor.u32 %v337, 8388608
    %v339 = vsub.s32 0, %v338
    %v340 = vadd.s32 %v335, 1
    %vm341 = vcmp.gt.s32.totalorder %v340, 0
    %v342 = vsel %vm341, %v340, 0
    %v343 = vshrl.u32 %v342, 5
    %v344 = vand.u32 %v342, 31
    %v345 = vsub.s32 32, %v344
    %v346 = vshrl.u32 683565275, %v345
    %v347 = vshll.u32 683565275, %v344
    %v348 = vshrl.u32 2475754826, %v345
    %v349 = vor.u32 %v347, %v348
    %v350 = vshll.u32 2475754826, %v344
    %v351 = vshrl.u32 2131351028, %v345
    %v352 = vor.u32 %v350, %v351
    %v353 = vshll.u32 2131351028, %v344
    %v354 = vshrl.u32 2102212464, %v345
    %v355 = vor.u32 %v353, %v354
    %v356 = vshll.u32 2102212464, %v344
    %v357 = vshrl.u32 920167782, %v345
    %v358 = vor.u32 %v356, %v357
    %v359 = vshll.u32 920167782, %v344
    %v360 = vshrl.u32 1326507024, %v345
    %v361 = vor.u32 %v359, %v360
    %vm362 = vcmp.lt.s32.totalorder %v343, 1
    %vm363 = vcmp.lt.s32.totalorder %v343, 2
    %vm364 = vcmp.lt.s32.totalorder %v343, 3
    %vm365 = vcmp.lt.s32.totalorder %v343, 4
    %v366 = vsel %vm362, %v346, %v349
    %v367 = vsel %vm365, %v355, 2102212464
    %v368 = vsel %vm364, %v352, %v367
    %v369 = vsel %vm363, %v366, %v368
    %v370 = vsel %vm362, %v349, %v352
    %v371 = vsel %vm365, %v358, 920167782
    %v372 = vsel %vm364, %v355, %v371
    %v373 = vsel %vm363, %v370, %v372
    %v374 = vsel %vm362, %v352, %v355
    %v375 = vsel %vm365, %v361, 1326507024
    %v376 = vsel %vm364, %v358, %v375
    %v377 = vsel %vm363, %v374, %v376
    %v378 = vshll.u32 %v338, 8
    %v379 = vmul.u32.u64.compose %v378, %v377
    %v380 = vextract.low.u32 %v379
    %v381 = vextract.high.u32 %v379
    %v382 = vmul.u32.u64.compose %v378, %v373
    %v383 = vextract.low.u32 %v382
    %v384 = vextract.high.u32 %v382
    %v385 = vmul.u32 %v378, %v369
    %v386 = vadd.s32 %v381, %v383
    %vm387 = vc.u32 %v381, %v383
    %v388 = vadd.s32 %v384, 1
    %v389 = vsel %vm387, %v388, %v384
    %v390 = vadd.s32 %v385, %v389
    %v391 = vadd.s32 %v390, 536870912
    %v392 = vshrl.u32 %v391, 30
    %v393 = vshll.u32 %v392, 30
    %v394 = vsub.s32 %v390, %v393
    %vm395 = vcmp.lt.s32.totalorder %v394, 0
    %v396 = vsub.s32 0, %v394
    %v397 = vsel %vm395, %v396, %v394
    %v398 = vclz %v397
    %v399 = vsub.s32 %v398, 2
    %vm400 = vcmp.gt.s32.totalorder 0, %v399
    %v401 = vsel %vm400, 0, %v399
    %v402 = vsub.s32 32, %v401
    %v403 = vshll.u32 %v394, %v401
    %v404 = vshrl.u32 %v386, %v402
    %v405 = vor.u32 %v403, %v404
    %v406 = vsub.s32 4294967266, %v401
    %v407 = vadd.s32 %v406, 127
    %v408 = vshll.u32 %v407, 23
    %v409 = vor.u32 4788187, %v408
    %v410 = vand.u32 2147483647, %v409
    %v412 = vcvt.s32.f32 %v405
    %v413 = vmul.f32 %v412, %v410
    %v414 = vxor.u32 %v413, 2147483648
    %v415 = vsel %vm332, %v414, %v413
    %v416 = vsub.s32 4, %v392
    %v417 = vsel %vm332, %v416, %v392
    %v418 = vsel %vm331, %v19, %v415
    %v419 = vsel %vm331, 0, %v417
    %v420 = vcosq.f32.pop %v418
    %v421 = vsinq.f32.pop %v418
    %vm422 = vweird.f32 %v19
    %v423 = vadd.s32 %v419, 3
    %v424 = vand.u32 %v423, 3
    %vm425 = vcmp.lt.s32.totalorder %v424, 2
    %vm426 = vcmp.eq.s32.totalorder %v424, 0
    %v427 = vxor.u32 %v421, 2147483648
    %v428 = vsel %vm426, %v420, %v427
    %vm429 = vcmp.eq.s32.totalorder %v424, 2
    %v430 = vxor.u32 %v420, 2147483648
    %v431 = vsel %vm429, %v430, %v421
    %v432 = vsel %vm425, %v428, %v431
    %v433 = vsel %vm422, nan, %v432
    %v434 = vlaneseq
    %v435 = vshrl.u32 %v434, 7
    %v436 = vadd.s32 %v435, 8
    %v437 = vshra.s32 %v435, 3
    %v438 = vshra.s32 %v436, 3
    %v439 = vand.u32 %v437, 1
    %v440 = vand.u32 %v438, 1
    %v441 = vcvt.s32.f32 %v439
    %v442 = vcvt.s32.f32 %v440
    %v443 = vsub.f32 1.0, %v441
    %v444 = vsub.f32 1.0, %v442
    %v447 = vlaneseq
    %v448 = vshrl.u32 %v447, 7
    %v449 = vsub.s32 0, %v448
    %v450 = vrot.slane %v122, %v449
    %v451 = vlaneseq
    %v452 = vshrl.u32 %v451, 7
    %v453 = vsub.s32 4, %v452
    %v454 = vrot.slane %v122, %v453
    %v455 = vlaneseq
    %v456 = vshrl.u32 %v455, 7
    %v457 = vsub.s32 0, %v456
    %v458 = vrot.slane %v225, %v457
    %v459 = vlaneseq
    %v460 = vshrl.u32 %v459, 7
    %v461 = vsub.s32 4, %v460
    %v462 = vrot.slane %v225, %v461
    %v467 = vlaneseq
    %v468 = vshrl.u32 %v467, 7
    %v469 = vsub.s32 0, %v468
    %v470 = vrot.slane %v450, %v469
    %v471 = vlaneseq
    %v472 = vshrl.u32 %v471, 7
    %v473 = vsub.s32 0, %v472
    %v474 = vrot.slane %v454, %v473
    %v475 = vlaneseq
    %v476 = vshrl.u32 %v475, 7
    %v477 = vsub.s32 0, %v476
    %v478 = vrot.slane %v458, %v477
    %v479 = vlaneseq
    %v480 = vshrl.u32 %v479, 7
    %v481 = vsub.s32 0, %v480
    %v482 = vrot.slane %v462, %v481
    %v483 = vmul.f32 %v470, %v443
    %v484 = vmul.f32 %v474, %v443
    %v485 = vmul.f32 %v478, %v443
    %v486 = vmul.f32 %v482, %v443
    %v487 = vmul.f32 %v470, %v444
    %v488 = vmul.f32 %v474, %v444
    %v489 = vmul.f32 %v478, %v444
    %v490 = vmul.f32 %v482, %v444
    %v493 = vlaneseq
    %v494 = vshrl.u32 %v493, 7
    %v495 = vsub.s32 0, %v494
    %v496 = vrot.slane %v329, %v495
    %v497 = vlaneseq
    %v498 = vshrl.u32 %v497, 7
    %v499 = vsub.s32 4, %v498
    %v500 = vrot.slane %v329, %v499
    %v501 = vlaneseq
    %v502 = vshrl.u32 %v501, 7
    %v503 = vsub.s32 0, %v502
    %v504 = vrot.slane %v433, %v503
    %v505 = vlaneseq
    %v506 = vshrl.u32 %v505, 7
    %v507 = vsub.s32 4, %v506
    %v508 = vrot.slane %v433, %v507
    %v513 = vlaneseq
    %v514 = vshrl.u32 %v513, 7
    %v515 = vsub.s32 0, %v514
    %v516 = vrot.slane %v496, %v515
    %v517 = vlaneseq
    %v518 = vshrl.u32 %v517, 7
    %v519 = vsub.s32 0, %v518
    %v520 = vrot.slane %v500, %v519
    %v521 = vlaneseq
    %v522 = vshrl.u32 %v521, 7
    %v523 = vsub.s32 0, %v522
    %v524 = vrot.slane %v504, %v523
    %v525 = vlaneseq
    %v526 = vshrl.u32 %v525, 7
    %v527 = vsub.s32 0, %v526
    %v528 = vrot.slane %v508, %v527
    %v529 = vmul.f32 %v516, %v441
    %v530 = vmul.f32 %v520, %v441
    %v531 = vmul.f32 %v524, %v441
    %v532 = vmul.f32 %v528, %v441
    %v533 = vmul.f32 %v516, %v442
    %v534 = vmul.f32 %v520, %v442
    %v535 = vmul.f32 %v524, %v442
    %v536 = vmul.f32 %v528, %v442
    %v537 = vadd.f32 %v483, %v529
    %v538 = vadd.f32 %v484, %v530
    %v539 = vadd.f32 %v485, %v531
    %v540 = vadd.f32 %v486, %v532
    %v541 = vadd.f32 %v487, %v533
    %v542 = vadd.f32 %v488, %v534
    %v543 = vadd.f32 %v489, %v535
    %v544 = vadd.f32 %v490, %v536
    %v545 = vshra.s32 %v435, 2
    %v546 = vshra.s32 %v436, 2
    %v547 = vand.u32 %v545, 1
    %v548 = vand.u32 %v546, 1
    %v549 = vcvt.s32.f32 %v547
    %v550 = vcvt.s32.f32 %v548
    %v551 = vsub.f32 1.0, %v549
    %v552 = vsub.f32 1.0, %v550
    %v553 = vlaneseq
    %v554 = vshrl.u32 %v553, 7
    %v555 = vsub.s32 1, %v554
    %v556 = vrot.slane %v122, %v555
    %v557 = vlaneseq
    %v558 = vshrl.u32 %v557, 7
    %v559 = vsub.s32 5, %v558
    %v560 = vrot.slane %v122, %v559
    %v561 = vlaneseq
    %v562 = vshrl.u32 %v561, 7
    %v563 = vsub.s32 1, %v562
    %v564 = vrot.slane %v225, %v563
    %v565 = vlaneseq
    %v566 = vshrl.u32 %v565, 7
    %v567 = vsub.s32 5, %v566
    %v568 = vrot.slane %v225, %v567
    %v573 = vlaneseq
    %v574 = vshrl.u32 %v573, 7
    %v575 = vsub.s32 1, %v574
    %v576 = vrot.slane %v556, %v575
    %v577 = vlaneseq
    %v578 = vshrl.u32 %v577, 7
    %v579 = vsub.s32 1, %v578
    %v580 = vrot.slane %v560, %v579
    %v581 = vlaneseq
    %v582 = vshrl.u32 %v581, 7
    %v583 = vsub.s32 1, %v582
    %v584 = vrot.slane %v564, %v583
    %v585 = vlaneseq
    %v586 = vshrl.u32 %v585, 7
    %v587 = vsub.s32 1, %v586
    %v588 = vrot.slane %v568, %v587
    %v589 = vmul.f32 %v576, %v551
    %v590 = vmul.f32 %v580, %v551
    %v591 = vmul.f32 %v584, %v551
    %v592 = vmul.f32 %v588, %v551
    %v593 = vmul.f32 %v576, %v552
    %v594 = vmul.f32 %v580, %v552
    %v595 = vmul.f32 %v584, %v552
    %v596 = vmul.f32 %v588, %v552
    %v597 = vlaneseq
    %v598 = vshrl.u32 %v597, 7
    %v599 = vsub.s32 1, %v598
    %v600 = vrot.slane %v329, %v599
    %v601 = vlaneseq
    %v602 = vshrl.u32 %v601, 7
    %v603 = vsub.s32 5, %v602
    %v604 = vrot.slane %v329, %v603
    %v605 = vlaneseq
    %v606 = vshrl.u32 %v605, 7
    %v607 = vsub.s32 1, %v606
    %v608 = vrot.slane %v433, %v607
    %v609 = vlaneseq
    %v610 = vshrl.u32 %v609, 7
    %v611 = vsub.s32 5, %v610
    %v612 = vrot.slane %v433, %v611
    %v617 = vlaneseq
    %v618 = vshrl.u32 %v617, 7
    %v619 = vsub.s32 1, %v618
    %v620 = vrot.slane %v600, %v619
    %v621 = vlaneseq
    %v622 = vshrl.u32 %v621, 7
    %v623 = vsub.s32 1, %v622
    %v624 = vrot.slane %v604, %v623
    %v625 = vlaneseq
    %v626 = vshrl.u32 %v625, 7
    %v627 = vsub.s32 1, %v626
    %v628 = vrot.slane %v608, %v627
    %v629 = vlaneseq
    %v630 = vshrl.u32 %v629, 7
    %v631 = vsub.s32 1, %v630
    %v632 = vrot.slane %v612, %v631
    %v633 = vmul.f32 %v620, %v549
    %v634 = vmul.f32 %v624, %v549
    %v635 = vmul.f32 %v628, %v549
    %v636 = vmul.f32 %v632, %v549
    %v637 = vmul.f32 %v620, %v550
    %v638 = vmul.f32 %v624, %v550
    %v639 = vmul.f32 %v628, %v550
    %v640 = vmul.f32 %v632, %v550
    %v641 = vadd.f32 %v589, %v633
    %v642 = vadd.f32 %v590, %v634
    %v643 = vadd.f32 %v591, %v635
    %v644 = vadd.f32 %v592, %v636
    %v645 = vadd.f32 %v593, %v637
    %v646 = vadd.f32 %v594, %v638
    %v647 = vadd.f32 %v595, %v639
    %v648 = vadd.f32 %v596, %v640
    %v649 = vmul.f32 %v537, %v641
    %v650 = vmul.f32 %v538, %v642
    %v651 = vmul.f32 %v539, %v643
    %v652 = vmul.f32 %v540, %v644
    %v653 = vmul.f32 %v541, %v645
    %v654 = vmul.f32 %v542, %v646
    %v655 = vmul.f32 %v543, %v647
    %v656 = vmul.f32 %v544, %v648
    %v657 = vshra.s32 %v435, 1
    %v658 = vshra.s32 %v436, 1
    %v659 = vand.u32 %v657, 1
    %v660 = vand.u32 %v658, 1
    %v661 = vcvt.s32.f32 %v659
    %v662 = vcvt.s32.f32 %v660
    %v663 = vsub.f32 1.0, %v661
    %v664 = vsub.f32 1.0, %v662
    %v665 = vlaneseq
    %v666 = vshrl.u32 %v665, 7
    %v667 = vsub.s32 2, %v666
    %v668 = vrot.slane %v122, %v667
    %v669 = vlaneseq
    %v670 = vshrl.u32 %v669, 7
    %v671 = vsub.s32 6, %v670
    %v672 = vrot.slane %v122, %v671
    %v673 = vlaneseq
    %v674 = vshrl.u32 %v673, 7
    %v675 = vsub.s32 2, %v674
    %v676 = vrot.slane %v225, %v675
    %v677 = vlaneseq
    %v678 = vshrl.u32 %v677, 7
    %v679 = vsub.s32 6, %v678
    %v680 = vrot.slane %v225, %v679
    %v685 = vlaneseq
    %v686 = vshrl.u32 %v685, 7
    %v687 = vsub.s32 2, %v686
    %v688 = vrot.slane %v668, %v687
    %v689 = vlaneseq
    %v690 = vshrl.u32 %v689, 7
    %v691 = vsub.s32 2, %v690
    %v692 = vrot.slane %v672, %v691
    %v693 = vlaneseq
    %v694 = vshrl.u32 %v693, 7
    %v695 = vsub.s32 2, %v694
    %v696 = vrot.slane %v676, %v695
    %v697 = vlaneseq
    %v698 = vshrl.u32 %v697, 7
    %v699 = vsub.s32 2, %v698
    %v700 = vrot.slane %v680, %v699
    %v701 = vmul.f32 %v688, %v663
    %v702 = vmul.f32 %v692, %v663
    %v703 = vmul.f32 %v696, %v663
    %v704 = vmul.f32 %v700, %v663
    %v705 = vmul.f32 %v688, %v664
    %v706 = vmul.f32 %v692, %v664
    %v707 = vmul.f32 %v696, %v664
    %v708 = vmul.f32 %v700, %v664
    %v709 = vlaneseq
    %v710 = vshrl.u32 %v709, 7
    %v711 = vsub.s32 2, %v710
    %v712 = vrot.slane %v329, %v711
    %v713 = vlaneseq
    %v714 = vshrl.u32 %v713, 7
    %v715 = vsub.s32 6, %v714
    %v716 = vrot.slane %v329, %v715
    %v717 = vlaneseq
    %v718 = vshrl.u32 %v717, 7
    %v719 = vsub.s32 2, %v718
    %v720 = vrot.slane %v433, %v719
    %v721 = vlaneseq
    %v722 = vshrl.u32 %v721, 7
    %v723 = vsub.s32 6, %v722
    %v724 = vrot.slane %v433, %v723
    %v729 = vlaneseq
    %v730 = vshrl.u32 %v729, 7
    %v731 = vsub.s32 2, %v730
    %v732 = vrot.slane %v712, %v731
    %v733 = vlaneseq
    %v734 = vshrl.u32 %v733, 7
    %v735 = vsub.s32 2, %v734
    %v736 = vrot.slane %v716, %v735
    %v737 = vlaneseq
    %v738 = vshrl.u32 %v737, 7
    %v739 = vsub.s32 2, %v738
    %v740 = vrot.slane %v720, %v739
    %v741 = vlaneseq
    %v742 = vshrl.u32 %v741, 7
    %v743 = vsub.s32 2, %v742
    %v744 = vrot.slane %v724, %v743
    %v745 = vmul.f32 %v732, %v661
    %v746 = vmul.f32 %v736, %v661
    %v747 = vmul.f32 %v740, %v661
    %v748 = vmul.f32 %v744, %v661
    %v749 = vmul.f32 %v732, %v662
    %v750 = vmul.f32 %v736, %v662
    %v751 = vmul.f32 %v740, %v662
    %v752 = vmul.f32 %v744, %v662
    %v753 = vadd.f32 %v701, %v745
    %v754 = vadd.f32 %v702, %v746
    %v755 = vadd.f32 %v703, %v747
    %v756 = vadd.f32 %v704, %v748
    %v757 = vadd.f32 %v705, %v749
    %v758 = vadd.f32 %v706, %v750
    %v759 = vadd.f32 %v707, %v751
    %v760 = vadd.f32 %v708, %v752
    %v761 = vmul.f32 %v649, %v753
    %v762 = vmul.f32 %v650, %v754
    %v763 = vmul.f32 %v651, %v755
    %v764 = vmul.f32 %v652, %v756
    %v765 = vmul.f32 %v653, %v757
    %v766 = vmul.f32 %v654, %v758
    %v767 = vmul.f32 %v655, %v759
    %v768 = vmul.f32 %v656, %v760
    %v769 = vand.u32 %v435, 1
    %v770 = vand.u32 %v436, 1
    %v771 = vcvt.s32.f32 %v769
    %v772 = vcvt.s32.f32 %v770
    %v773 = vsub.f32 1.0, %v771
    %v774 = vsub.f32 1.0, %v772
    %v775 = vlaneseq
    %v776 = vshrl.u32 %v775, 7
    %v777 = vsub.s32 3, %v776
    %v778 = vrot.slane %v122, %v777
    %v779 = vlaneseq
    %v780 = vshrl.u32 %v779, 7
    %v781 = vsub.s32 7, %v780
    %v782 = vrot.slane %v122, %v781
    %v783 = vlaneseq
    %v784 = vshrl.u32 %v783, 7
    %v785 = vsub.s32 3, %v784
    %v786 = vrot.slane %v225, %v785
    %v787 = vlaneseq
    %v788 = vshrl.u32 %v787, 7
    %v789 = vsub.s32 7, %v788
    %v790 = vrot.slane %v225, %v789
    %v795 = vlaneseq
    %v796 = vshrl.u32 %v795, 7
    %v797 = vsub.s32 3, %v796
    %v798 = vrot.slane %v778, %v797
    %v799 = vlaneseq
    %v800 = vshrl.u32 %v799, 7
    %v801 = vsub.s32 3, %v800
    %v802 = vrot.slane %v782, %v801
    %v803 = vlaneseq
    %v804 = vshrl.u32 %v803, 7
    %v805 = vsub.s32 3, %v804
    %v806 = vrot.slane %v786, %v805
    %v807 = vlaneseq
    %v808 = vshrl.u32 %v807, 7
    %v809 = vsub.s32 3, %v808
    %v810 = vrot.slane %v790, %v809
    %v811 = vmul.f32 %v798, %v773
    %v812 = vmul.f32 %v802, %v773
    %v813 = vmul.f32 %v806, %v773
    %v814 = vmul.f32 %v810, %v773
    %v815 = vmul.f32 %v798, %v774
    %v816 = vmul.f32 %v802, %v774
    %v817 = vmul.f32 %v806, %v774
    %v818 = vmul.f32 %v810, %v774
    %v819 = vlaneseq
    %v820 = vshrl.u32 %v819, 7
    %v821 = vsub.s32 3, %v820
    %v822 = vrot.slane %v329, %v821
    %v823 = vlaneseq
    %v824 = vshrl.u32 %v823, 7
    %v825 = vsub.s32 7, %v824
    %v826 = vrot.slane %v329, %v825
    %v827 = vlaneseq
    %v828 = vshrl.u32 %v827, 7
    %v829 = vsub.s32 3, %v828
    %v830 = vrot.slane %v433, %v829
    %v831 = vlaneseq
    %v832 = vshrl.u32 %v831, 7
    %v833 = vsub.s32 7, %v832
    %v834 = vrot.slane %v433, %v833
    %v839 = vlaneseq
    %v840 = vshrl.u32 %v839, 7
    %v841 = vsub.s32 3, %v840
    %v842 = vrot.slane %v822, %v841
    %v843 = vlaneseq
    %v844 = vshrl.u32 %v843, 7
    %v845 = vsub.s32 3, %v844
    %v846 = vrot.slane %v826, %v845
    %v847 = vlaneseq
    %v848 = vshrl.u32 %v847, 7
    %v849 = vsub.s32 3, %v848
    %v850 = vrot.slane %v830, %v849
    %v851 = vlaneseq
    %v852 = vshrl.u32 %v851, 7
    %v853 = vsub.s32 3, %v852
    %v854 = vrot.slane %v834, %v853
    %v855 = vmul.f32 %v842, %v771
    %v856 = vmul.f32 %v846, %v771
    %v857 = vmul.f32 %v850, %v771
    %v858 = vmul.f32 %v854, %v771
    %v859 = vmul.f32 %v842, %v772
    %v860 = vmul.f32 %v846, %v772
    %v861 = vmul.f32 %v850, %v772
    %v862 = vmul.f32 %v854, %v772
    %v863 = vadd.f32 %v811, %v855
    %v864 = vadd.f32 %v812, %v856
    %v865 = vadd.f32 %v813, %v857
    %v866 = vadd.f32 %v814, %v858
    %v867 = vadd.f32 %v815, %v859
    %v868 = vadd.f32 %v816, %v860
    %v869 = vadd.f32 %v817, %v861
    %v870 = vadd.f32 %v818, %v862
    %v871 = vmul.f32 %v761, %v863
    %v872 = vmul.f32 %v762, %v864
    %v873 = vmul.f32 %v763, %v865
    %v874 = vmul.f32 %v764, %v866
    %v875 = vmul.f32 %v765, %v867
    %v876 = vmul.f32 %v766, %v868
    %v877 = vmul.f32 %v767, %v869
    %v878 = vmul.f32 %v768, %v870
    %v879 = vld [vmem:[%s1] sm:$0xff]
    %v880 = vld [vmem:[%s1 + $0x8] sm:$0xff]
    %v881 = vld [vmem:[%s1 + $0x10] sm:$0xff]
    %v882 = vld [vmem:[%s1 + $0x18] sm:$0xff]
    %v883 = vld [vmem:[%s1 + $0x20] sm:$0xff]
    %v884 = vld [vmem:[%s1 + $0x28] sm:$0xff]
    %v885 = vld [vmem:[%s1 + $0x30] sm:$0xff]
    %v886 = vld [vmem:[%s1 + $0x38] sm:$0xff]
    %vm887 = vcmask 130048
    %v889 = vsel %vm887, %v879, 0
    %v892 = vsel %vm887, %v880, 0
    %v895 = vsel %vm887, %v881, 0
    %v898 = vsel %vm887, %v882, 0
    %v901 = vsel %vm887, %v883, 0
    %v904 = vsel %vm887, %v884, 0
    %v907 = vsel %vm887, %v885, 0
    %v910 = vsel %vm887, %v886, 0
    %912 = vmatprep.subr.mxu0 %v872
    %913 = vmatpush1.msra.mxu0 %v871
    %914 = vmatprep.subr.mxu0 %v876
    %915 = vmatpush1.msra.mxu0 %v875
    %916 = vmatprep.subr.mxu0 0.0
    %917 = vmatpush1.msra.mxu0 0.0
    %918 = vmatprep.subr.mxu0 0.0
    %919 = vmatpush1.msra.mxu0 0.0
    %920 = vmatprep.subr.mxu0 0.0
    %921 = vmatpush1.msra.mxu0 0.0
    %922 = vmatprep.subr.mxu0 0.0
    %923 = vmatpush1.msra.mxu0 0.0
    %924 = vmatprep.subr.mxu0 0.0
    %925 = vmatpush1.msra.mxu0 0.0
    %926 = vmatprep.subr.mxu0 0.0
    %927 = vmatpush1.msra.mxu0 0.0
    %928 = vmatprep.subr.mxu0 0.0
    %929 = vmatpush1.msra.mxu0 0.0
    %930 = vmatprep.subr.mxu0 0.0
    %931 = vmatpush1.msra.mxu0 0.0
    %932 = vmatprep.subr.mxu0 0.0
    %933 = vmatpush1.msra.mxu0 0.0
    %934 = vmatprep.subr.mxu0 0.0
    %935 = vmatpush1.msra.mxu0 0.0
    %936 = vmatprep.subr.mxu0 0.0
    %937 = vmatpush1.msra.mxu0 0.0
    %938 = vmatprep.subr.mxu0 0.0
    %939 = vmatpush1.msra.mxu0 0.0
    %940 = vmatprep.subr.mxu0 0.0
    %941 = vmatpush1.msra.mxu0 0.0
    %942 = vmatprep.subr.mxu0 0.0
    %943 = vmatpush1.msra.mxu0 0.0
    %944 = vmatprep.subr.mxu0 0.0
    %945 = vmatpush1.msra.mxu0 0.0
    %946 = vmatprep.subr.mxu0 0.0
    %947 = vmatpush1.msra.mxu0 0.0
    %948 = vmatprep.subr.mxu0 0.0
    %949 = vmatpush1.msra.mxu0 0.0
    %950 = vmatprep.subr.mxu0 0.0
    %951 = vmatpush1.msra.mxu0 0.0
    %952 = vmatprep.subr.mxu0 0.0
    %953 = vmatpush1.msra.mxu0 0.0
    %954 = vmatprep.subr.mxu0 0.0
    %955 = vmatpush1.msra.mxu0 0.0
    %956 = vmatprep.subr.mxu0 0.0
    %957 = vmatpush1.msra.mxu0 0.0
    %958 = vmatprep.subr.mxu0 0.0
    %959 = vmatpush1.msra.mxu0 0.0
    %960 = vmatprep.subr.mxu0 0.0
    %961 = vmatpush1.msra.mxu0 0.0
    %962 = vmatprep.subr.mxu0 0.0
    %963 = vmatpush1.msra.mxu0 0.0
    %964 = vmatprep.subr.mxu0 0.0
    %965 = vmatpush1.msra.mxu0 0.0
    %966 = vmatprep.subr.mxu0 0.0
    %967 = vmatpush1.msra.mxu0 0.0
    %968 = vmatprep.subr.mxu0 0.0
    %969 = vmatpush1.msra.mxu0 0.0
    %970 = vmatprep.subr.mxu0 0.0
    %971 = vmatpush1.msra.mxu0 0.0
    %972 = vmatprep.subr.mxu0 0.0
    %973 = vmatpush1.msra.mxu0 0.0
    %974 = vmatprep.subr.mxu0 0.0
    %975 = vmatpush1.msra.mxu0 0.0
    %976 = vmatprep.mubr.f32.mxu0 0.0
    %977 = vmatmul.mubr.f32.gmra.mrb[0].mxu0 %v889
    %v978 = vpop.f32.mrb[0].mxu0
    %v979 = vadd.f32 0.0, %v978
    %v980 = vpop.f32.mrb[0].mxu0
    %v981 = vadd.f32 0.0, %v980
    %982 = vmatprep.mubr.f32.mxu0 0.0
    %983 = vmatmul.mubr.f32.gmra.mrb[0].mxu0 %v892
    %v984 = vpop.f32.mrb[0].mxu0
    %v985 = vadd.f32 0.0, %v984
    %v986 = vpop.f32.mrb[0].mxu0
    %v987 = vadd.f32 0.0, %v986
    %988 = vmatprep.mubr.f32.mxu0 0.0
    %989 = vmatmul.mubr.f32.gmra.mrb[0].mxu0 %v895
    %v990 = vpop.f32.mrb[0].mxu0
    %v991 = vadd.f32 0.0, %v990
    %v992 = vpop.f32.mrb[0].mxu0
    %v993 = vadd.f32 0.0, %v992
    %994 = vmatprep.mubr.f32.mxu0 0.0
    %995 = vmatmul.mubr.f32.gmra.mrb[0].mxu0 %v898
    %v996 = vpop.f32.mrb[0].mxu0
    %v997 = vadd.f32 0.0, %v996
    %v998 = vpop.f32.mrb[0].mxu0
    %v999 = vadd.f32 0.0, %v998
    %1000 = vmatprep.mubr.f32.mxu0 0.0
    %1001 = vmatmul.mubr.f32.gmra.mrb[0].mxu0 %v901
    %v1002 = vpop.f32.mrb[0].mxu0
    %v1003 = vadd.f32 0.0, %v1002
    %v1004 = vpop.f32.mrb[0].mxu0
    %v1005 = vadd.f32 0.0, %v1004
    %1006 = vmatprep.mubr.f32.mxu0 0.0
    %1007 = vmatmul.mubr.f32.gmra.mrb[0].mxu0 %v904
    %v1008 = vpop.f32.mrb[0].mxu0
    %v1009 = vadd.f32 0.0, %v1008
    %v1010 = vpop.f32.mrb[0].mxu0
    %v1011 = vadd.f32 0.0, %v1010
    %1012 = vmatprep.mubr.f32.mxu0 0.0
    %1013 = vmatmul.mubr.f32.gmra.mrb[0].mxu0 %v907
    %v1014 = vpop.f32.mrb[0].mxu0
    %v1015 = vadd.f32 0.0, %v1014
    %v1016 = vpop.f32.mrb[0].mxu0
    %v1017 = vadd.f32 0.0, %v1016
    %1018 = vmatprep.mubr.f32.mxu0 0.0
    %1019 = vmatmul.mubr.f32.gmra.mrb[0].mxu0 %v910
    %v1020 = vpop.f32.mrb[0].mxu0
    %v1021 = vadd.f32 0.0, %v1020
    %v1022 = vpop.f32.mrb[0].mxu0
    %v1023 = vadd.f32 0.0, %v1022
    %1024 = vdwg.mxu0
    %1025 = vmatprep.subr.mxu0 %v874
    %1026 = vmatpush1.msra.mxu0 %v873
    %1027 = vmatprep.subr.mxu0 %v878
    %1028 = vmatpush1.msra.mxu0 %v877
    %1029 = vmatprep.subr.mxu0 0.0
    %1030 = vmatpush1.msra.mxu0 0.0
    %1031 = vmatprep.subr.mxu0 0.0
    %1032 = vmatpush1.msra.mxu0 0.0
    %1033 = vmatprep.subr.mxu0 0.0
    %1034 = vmatpush1.msra.mxu0 0.0
    %1035 = vmatprep.subr.mxu0 0.0
    %1036 = vmatpush1.msra.mxu0 0.0
    %1037 = vmatprep.subr.mxu0 0.0
    %1038 = vmatpush1.msra.mxu0 0.0
    %1039 = vmatprep.subr.mxu0 0.0
    %1040 = vmatpush1.msra.mxu0 0.0
    %1041 = vmatprep.subr.mxu0 0.0
    %1042 = vmatpush1.msra.mxu0 0.0
    %1043 = vmatprep.subr.mxu0 0.0
    %1044 = vmatpush1.msra.mxu0 0.0
    %1045 = vmatprep.subr.mxu0 0.0
    %1046 = vmatpush1.msra.mxu0 0.0
    %1047 = vmatprep.subr.mxu0 0.0
    %1048 = vmatpush1.msra.mxu0 0.0
    %1049 = vmatprep.subr.mxu0 0.0
    %1050 = vmatpush1.msra.mxu0 0.0
    %1051 = vmatprep.subr.mxu0 0.0
    %1052 = vmatpush1.msra.mxu0 0.0
    %1053 = vmatprep.subr.mxu0 0.0
    %1054 = vmatpush1.msra.mxu0 0.0
    %1055 = vmatprep.subr.mxu0 0.0
    %1056 = vmatpush1.msra.mxu0 0.0
    %1057 = vmatprep.subr.mxu0 0.0
    %1058 = vmatpush1.msra.mxu0 0.0
    %1059 = vmatprep.subr.mxu0 0.0
    %1060 = vmatpush1.msra.mxu0 0.0
    %1061 = vmatprep.subr.mxu0 0.0
    %1062 = vmatpush1.msra.mxu0 0.0
    %1063 = vmatprep.subr.mxu0 0.0
    %1064 = vmatpush1.msra.mxu0 0.0
    %1065 = vmatprep.subr.mxu0 0.0
    %1066 = vmatpush1.msra.mxu0 0.0
    %1067 = vmatprep.subr.mxu0 0.0
    %1068 = vmatpush1.msra.mxu0 0.0
    %1069 = vmatprep.subr.mxu0 0.0
    %1070 = vmatpush1.msra.mxu0 0.0
    %1071 = vmatprep.subr.mxu0 0.0
    %1072 = vmatpush1.msra.mxu0 0.0
    %1073 = vmatprep.subr.mxu0 0.0
    %1074 = vmatpush1.msra.mxu0 0.0
    %1075 = vmatprep.subr.mxu0 0.0
    %1076 = vmatpush1.msra.mxu0 0.0
    %1077 = vmatprep.subr.mxu0 0.0
    %1078 = vmatpush1.msra.mxu0 0.0
    %1079 = vmatprep.subr.mxu0 0.0
    %1080 = vmatpush1.msra.mxu0 0.0
    %1081 = vmatprep.subr.mxu0 0.0
    %1082 = vmatpush1.msra.mxu0 0.0
    %1083 = vmatprep.subr.mxu0 0.0
    %1084 = vmatpush1.msra.mxu0 0.0
    %1085 = vmatprep.subr.mxu0 0.0
    %1086 = vmatpush1.msra.mxu0 0.0
    %1087 = vmatprep.subr.mxu0 0.0
    %1088 = vmatpush1.msra.mxu0 0.0
    %1089 = vmatprep.mubr.f32.mxu0 0.0
    %1090 = vmatmul.mubr.f32.gmra.mrb[0].mxu0 %v889
    %v1091 = vpop.f32.mrb[0].mxu0
    %v1092 = vadd.f32 0.0, %v1091
    %v1093 = vpop.f32.mrb[0].mxu0
    %v1094 = vadd.f32 0.0, %v1093
    %1095 = vmatprep.mubr.f32.mxu0 0.0
    %1096 = vmatmul.mubr.f32.gmra.mrb[0].mxu0 %v892
    %v1097 = vpop.f32.mrb[0].mxu0
    %v1098 = vadd.f32 0.0, %v1097
    %v1099 = vpop.f32.mrb[0].mxu0
    %v1100 = vadd.f32 0.0, %v1099
    %1101 = vmatprep.mubr.f32.mxu0 0.0
    %1102 = vmatmul.mubr.f32.gmra.mrb[0].mxu0 %v895
    %v1103 = vpop.f32.mrb[0].mxu0
    %v1104 = vadd.f32 0.0, %v1103
    %v1105 = vpop.f32.mrb[0].mxu0
    %v1106 = vadd.f32 0.0, %v1105
    %1107 = vmatprep.mubr.f32.mxu0 0.0
    %1108 = vmatmul.mubr.f32.gmra.mrb[0].mxu0 %v898
    %v1109 = vpop.f32.mrb[0].mxu0
    %v1110 = vadd.f32 0.0, %v1109
    %v1111 = vpop.f32.mrb[0].mxu0
    %v1112 = vadd.f32 0.0, %v1111
    %1113 = vmatprep.mubr.f32.mxu0 0.0
    %1114 = vmatmul.mubr.f32.gmra.mrb[0].mxu0 %v901
    %v1115 = vpop.f32.mrb[0].mxu0
    %v1116 = vadd.f32 0.0, %v1115
    %v1117 = vpop.f32.mrb[0].mxu0
    %v1118 = vadd.f32 0.0, %v1117
    %1119 = vmatprep.mubr.f32.mxu0 0.0
    %1120 = vmatmul.mubr.f32.gmra.mrb[0].mxu0 %v904
    %v1121 = vpop.f32.mrb[0].mxu0
    %v1122 = vadd.f32 0.0, %v1121
    %v1123 = vpop.f32.mrb[0].mxu0
    %v1124 = vadd.f32 0.0, %v1123
    %1125 = vmatprep.mubr.f32.mxu0 0.0
    %1126 = vmatmul.mubr.f32.gmra.mrb[0].mxu0 %v907
    %v1127 = vpop.f32.mrb[0].mxu0
    %v1128 = vadd.f32 0.0, %v1127
    %v1129 = vpop.f32.mrb[0].mxu0
    %v1130 = vadd.f32 0.0, %v1129
    %1131 = vmatprep.mubr.f32.mxu0 0.0
    %1132 = vmatmul.mubr.f32.gmra.mrb[0].mxu0 %v910
    %v1133 = vpop.f32.mrb[0].mxu0
    %v1134 = vadd.f32 0.0, %v1133
    %v1135 = vpop.f32.mrb[0].mxu0
    %v1136 = vadd.f32 0.0, %v1135
    %1137 = vdwg.mxu0
    %v1138 = vmul.f32 %v871, %v979
    %v1139 = vmul.f32 %v872, %v981
    %v1140 = vmul.f32 %v873, %v1092
    %v1141 = vmul.f32 %v874, %v1094
    %v1142 = vmul.f32 %v875, %v985
    %v1143 = vmul.f32 %v876, %v987
    %v1144 = vmul.f32 %v877, %v1098
    %v1145 = vmul.f32 %v878, %v1100
    %v1146 = vadd.f32 %v1138, %v1142
    %v1147 = vrot.slane %v1146, 4
    %v1148 = vadd.f32 %v1146, %v1147
    %v1149 = vrot.slane %v1148, 2
    %v1150 = vadd.f32 %v1148, %v1149
    %v1151 = vrot.slane %v1150, 1
    %v1152 = vadd.f32 %v1150, %v1151
    %v1153 = vadd.f32 %v1139, %v1143
    %v1154 = vrot.slane %v1153, 4
    %v1155 = vadd.f32 %v1153, %v1154
    %v1156 = vrot.slane %v1155, 2
    %v1157 = vadd.f32 %v1155, %v1156
    %v1158 = vrot.slane %v1157, 1
    %v1159 = vadd.f32 %v1157, %v1158
    %v1160 = vadd.f32 %v1140, %v1144
    %v1161 = vrot.slane %v1160, 4
    %v1162 = vadd.f32 %v1160, %v1161
    %v1163 = vrot.slane %v1162, 2
    %v1164 = vadd.f32 %v1162, %v1163
    %v1165 = vrot.slane %v1164, 1
    %v1166 = vadd.f32 %v1164, %v1165
    %v1167 = vadd.f32 %v1141, %v1145
    %v1168 = vrot.slane %v1167, 4
    %v1169 = vadd.f32 %v1167, %v1168
    %v1170 = vrot.slane %v1169, 2
    %v1171 = vadd.f32 %v1169, %v1170
    %v1172 = vrot.slane %v1171, 1
    %v1173 = vadd.f32 %v1171, %v1172
    %v1174 = vmul.f32 %v871, %v991
    %v1175 = vmul.f32 %v872, %v993
    %v1176 = vmul.f32 %v873, %v1104
    %v1177 = vmul.f32 %v874, %v1106
    %v1178 = vmul.f32 %v875, %v997
    %v1179 = vmul.f32 %v876, %v999
    %v1180 = vmul.f32 %v877, %v1110
    %v1181 = vmul.f32 %v878, %v1112
    %v1182 = vadd.f32 %v1174, %v1178
    %v1183 = vrot.slane %v1182, 4
    %v1184 = vadd.f32 %v1182, %v1183
    %v1185 = vrot.slane %v1184, 2
    %v1186 = vadd.f32 %v1184, %v1185
    %v1187 = vrot.slane %v1186, 1
    %v1188 = vadd.f32 %v1186, %v1187
    %v1189 = vadd.f32 %v1175, %v1179
    %v1190 = vrot.slane %v1189, 4
    %v1191 = vadd.f32 %v1189, %v1190
    %v1192 = vrot.slane %v1191, 2
    %v1193 = vadd.f32 %v1191, %v1192
    %v1194 = vrot.slane %v1193, 1
    %v1195 = vadd.f32 %v1193, %v1194
    %v1196 = vadd.f32 %v1176, %v1180
    %v1197 = vrot.slane %v1196, 4
    %v1198 = vadd.f32 %v1196, %v1197
    %v1199 = vrot.slane %v1198, 2
    %v1200 = vadd.f32 %v1198, %v1199
    %v1201 = vrot.slane %v1200, 1
    %v1202 = vadd.f32 %v1200, %v1201
    %v1203 = vadd.f32 %v1177, %v1181
    %v1204 = vrot.slane %v1203, 4
    %v1205 = vadd.f32 %v1203, %v1204
    %v1206 = vrot.slane %v1205, 2
    %v1207 = vadd.f32 %v1205, %v1206
    %v1208 = vrot.slane %v1207, 1
    %v1209 = vadd.f32 %v1207, %v1208
    %v1210 = vmul.f32 %v871, %v1003
    %v1211 = vmul.f32 %v872, %v1005
    %v1212 = vmul.f32 %v873, %v1116
    %v1213 = vmul.f32 %v874, %v1118
    %v1214 = vmul.f32 %v875, %v1009
    %v1215 = vmul.f32 %v876, %v1011
    %v1216 = vmul.f32 %v877, %v1122
    %v1217 = vmul.f32 %v878, %v1124
    %v1218 = vadd.f32 %v1210, %v1214
    %v1219 = vrot.slane %v1218, 4
    %v1220 = vadd.f32 %v1218, %v1219
    %v1221 = vrot.slane %v1220, 2
    %v1222 = vadd.f32 %v1220, %v1221
    %v1223 = vrot.slane %v1222, 1
    %v1224 = vadd.f32 %v1222, %v1223
    %v1225 = vadd.f32 %v1211, %v1215
    %v1226 = vrot.slane %v1225, 4
    %v1227 = vadd.f32 %v1225, %v1226
    %v1228 = vrot.slane %v1227, 2
    %v1229 = vadd.f32 %v1227, %v1228
    %v1230 = vrot.slane %v1229, 1
    %v1231 = vadd.f32 %v1229, %v1230
    %v1232 = vadd.f32 %v1212, %v1216
    %v1233 = vrot.slane %v1232, 4
    %v1234 = vadd.f32 %v1232, %v1233
    %v1235 = vrot.slane %v1234, 2
    %v1236 = vadd.f32 %v1234, %v1235
    %v1237 = vrot.slane %v1236, 1
    %v1238 = vadd.f32 %v1236, %v1237
    %v1239 = vadd.f32 %v1213, %v1217
    %v1240 = vrot.slane %v1239, 4
    %v1241 = vadd.f32 %v1239, %v1240
    %v1242 = vrot.slane %v1241, 2
    %v1243 = vadd.f32 %v1241, %v1242
    %v1244 = vrot.slane %v1243, 1
    %v1245 = vadd.f32 %v1243, %v1244
    %v1246 = vmul.f32 %v871, %v1015
    %v1247 = vmul.f32 %v872, %v1017
    %v1248 = vmul.f32 %v873, %v1128
    %v1249 = vmul.f32 %v874, %v1130
    %v1250 = vmul.f32 %v875, %v1021
    %v1251 = vmul.f32 %v876, %v1023
    %v1252 = vmul.f32 %v877, %v1134
    %v1253 = vmul.f32 %v878, %v1136
    %v1254 = vadd.f32 %v1246, %v1250
    %v1255 = vrot.slane %v1254, 4
    %v1256 = vadd.f32 %v1254, %v1255
    %v1257 = vrot.slane %v1256, 2
    %v1258 = vadd.f32 %v1256, %v1257
    %v1259 = vrot.slane %v1258, 1
    %v1260 = vadd.f32 %v1258, %v1259
    %v1261 = vadd.f32 %v1247, %v1251
    %v1262 = vrot.slane %v1261, 4
    %v1263 = vadd.f32 %v1261, %v1262
    %v1264 = vrot.slane %v1263, 2
    %v1265 = vadd.f32 %v1263, %v1264
    %v1266 = vrot.slane %v1265, 1
    %v1267 = vadd.f32 %v1265, %v1266
    %v1268 = vadd.f32 %v1248, %v1252
    %v1269 = vrot.slane %v1268, 4
    %v1270 = vadd.f32 %v1268, %v1269
    %v1271 = vrot.slane %v1270, 2
    %v1272 = vadd.f32 %v1270, %v1271
    %v1273 = vrot.slane %v1272, 1
    %v1274 = vadd.f32 %v1272, %v1273
    %v1275 = vadd.f32 %v1249, %v1253
    %v1276 = vrot.slane %v1275, 4
    %v1277 = vadd.f32 %v1275, %v1276
    %v1278 = vrot.slane %v1277, 2
    %v1279 = vadd.f32 %v1277, %v1278
    %v1280 = vrot.slane %v1279, 1
    %v1281 = vadd.f32 %v1279, %v1280
    %vm1282 = vcmask 1040384
    %v1283 = vsel %vm1282, %v1152, %v1188
    %v1284 = vsel %vm1282, %v1159, %v1195
    %v1285 = vsel %vm1282, %v1166, %v1202
    %v1286 = vsel %vm1282, %v1173, %v1209
    %vm1287 = vcmask 1041408
    %v1288 = vsel %vm1287, %v1283, %v1224
    %v1289 = vsel %vm1287, %v1284, %v1231
    %v1290 = vsel %vm1287, %v1285, %v1238
    %v1291 = vsel %vm1287, %v1286, %v1245
    %vm1292 = vcmask 1042432
    %v1293 = vsel %vm1292, %v1288, %v1260
    %v1294 = vsel %vm1292, %v1289, %v1267
    %v1295 = vsel %vm1292, %v1290, %v1274
    %v1296 = vsel %vm1292, %v1291, %v1281
    %v1301 = vcombine.low %v1293, %v1294
    %v1302 = vcombine.low %v1295, %v1296
    %1305 = vst [vmem:[#allocation2] sm:$0xff] %v1301
    %1306 = vst [vmem:[#allocation2 + $0x8] sm:$0xff] %v1302
    // Predicated region
    $region10: #{tpu_custom_call.1} parent=1 // pred_check
      _
    $region11: #{tpu_custom_call.1} parent=1 // pred_check_branch
      %1308 = sbr.rel (0) target = $region13
    $region12: #{tpu_custom_call.1} parent=1 // pred_region
      %s1310 = ssub.s32 256, 256
      %1311 = vsyncadd [#allocation3], %s1310
      %s1313 = sshll.u32 [#allocation2], 4
      %s1314 = int_to_ptr.vmem [resolvable:$true] %s1313
      %1316 = dma.vmem_to_hbm [thread:$0]  %s1314, 256, %s2, [#allocation3]
    $region13: #{tpu_custom_call.1} parent=1 // pred_fallthru
      _
    // Predicated region
    $region14: #{tpu_custom_call.1} parent=1 // pred_check
      _
    $region15: #{tpu_custom_call.1} parent=1 // pred_check_branch
      %1318 = sbr.rel (0) target = $region17
    $region16: #{tpu_custom_call.1} parent=1 // pred_region
      %1319 = dma.done [#allocation3], 256
    $region17: #{tpu_custom_call.1} parent=1 // pred_fallthru
      _
    %1320 = vsyncpa [#allocation3], 1

</llo_original>
